<compile_context>
chip_gen: v5e
topology: v5e:2x2
jax: 0.10.0
libtpu: 0.0.40
codegen_flags: <defaults>
</compile_context>

<pallas_src>
from functools import partial

import jax
import jax.numpy as jnp
from jax.experimental import pallas as pl
from jax.experimental.pallas import tpu as pltpu

LANE = 128
CHUNK_ROWS = 512           # in-kernel compute chunk: 512*128*4B = 256 KiB per f32 temp
MAX_BLOCK_ROWS = 8192      # DMA tile: 8192*128*4B = 4 MiB per f32 stream per grid step
VMEM_LIMIT_BYTES = 32 * 1024 * 1024


def _cdiv(a, b):
    return -(-a // b)


def _round_up(a, b):
    return _cdiv(a, b) * b


def _sublane(dtype):
    return {4: 8, 2: 16, 1: 32}.get(jnp.dtype(dtype).itemsize, 8)


def _bce_elementwise(x, t, w):
    """torch.sigmoid -> F.binary_cross_entropy, reproduced faithfully.

    p is materialised as fp32 1/(1+exp(-x)) so it saturates to exactly 1.0 for
    x >~ 16.6 (like torch.sigmoid in fp32), and both log terms are clamped at -100.
    """
    e = jnp.exp(-x)
    p = 1.0 / (1.0 + e)
    log_p = jnp.maximum(-jnp.log1p(e), -100.0)       # == clamp(log(p), -100) up to rounding
    log_1mp = jnp.maximum(jnp.log1p(-p), -100.0)     # -inf -> -100 exactly when p == 1.0
    loss = -(t * log_p + (1.0 - t) * log_1mp)
    if w is not None:
        loss = loss * w                              # weight applied before the tail mask
    return loss


def _accumulate_block(x_ref, t_ref, o_ref, weight_fn, *, block_rows, chunk_rows,
                      lane, n_valid, blk, masked):
    """Chunked elementwise BCE + partial-sum accumulation for one grid block.

    Compute walks (chunk_rows, lane) sub-tiles so temporaries stay small even when
    the DMA block is several MiB.
    """
    n_chunks = block_rows // chunk_rows
    full_rows = n_valid // lane      # rows that are entirely valid
    rem = n_valid % lane             # valid lanes of row `full_rows` (0 if lane-aligned)

    @pl.loop(0, n_chunks)
    def _(c):
        r0 = pl.multiple_of(c * chunk_rows, chunk_rows)
        x = x_ref[pl.ds(r0, chunk_rows), :].astype(jnp.float32)
        t = t_ref[pl.ds(r0, chunk_rows), :].astype(jnp.float32)
        w = weight_fn(t) if weight_fn is not None else None
        loss = _bce_elementwise(x, t, w)
        if masked:
            # Zero contributions from rows/lanes past the logical end of the input
            # (boundary / overhang blocks read unspecified data; padded tail lanes
            # must not count).  Row-based indices keep everything well inside int32.
            ridx = jax.lax.broadcasted_iota(jnp.int32, (chunk_rows, lane), 0)
            grow = blk * block_rows + r0 + ridx              # global row index
            valid = grow < full_rows
            if rem:
                lidx = jax.lax.broadcasted_iota(jnp.int32, (chunk_rows, lane), 1)
                valid = valid | ((grow == full_rows) & (lidx < rem))
            loss = jnp.where(valid, loss, 0.0)
        # VPU-only fold into the resident (1, 8, lane) accumulator block.
        o_ref[...] += loss.reshape(chunk_rows // 8, 8, lane).sum(axis=0).reshape(1, 8, lane)


def _bce_body(w_sref, x_ref, t_ref, o_ref, *, block_rows, chunk_rows, lane,
              n_valid, mask_tail, nclasses=0):
    i = pl.program_id(1)

    @pl.when(i == 0)
    def _():
        o_ref[...] = jnp.zeros_like(o_ref)

    # Per-class weight lookup (weight[target]) from SMEM scalars -- no extra HBM stream.
    if w_sref is None:
        weight_fn = None
    elif nclasses == 2:
        w0 = w_sref[0]
        w1 = w_sref[1]
        weight_fn = lambda t: w0 + t * (w1 - w0)     # weight[target] for 0/1 targets, one fma
    else:
        ws = [w_sref[c] for c in range(nclasses)]

        def weight_fn(t):
            t_int = jnp.round(t).astype(jnp.int32)
            w = jnp.zeros_like(t)
            for c, wc in enumerate(ws):              # small static class count: cheap selects
                w = jnp.where(t_int == c, wc, w)
            return w

    blk = pl.program_id(0) * pl.num_programs(1) + i  # global block index
    acc = partial(_accumulate_block, x_ref, t_ref, o_ref, weight_fn,
                  block_rows=block_rows, chunk_rows=chunk_rows, lane=lane,
                  n_valid=n_valid, blk=blk)
    if mask_tail:
        # Only blocks at/after this index can touch invalid elements; earlier blocks
        # skip the iota/compare mask entirely.
        first_masked = n_valid // (block_rows * lane)

        @pl.when(blk >= first_masked)
        def _():
            acc(masked=True)

        @pl.when(blk < first_masked)
        def _():
            acc(masked=False)
    else:
        acc(masked=False)


def _bce_kernel(x_ref, t_ref, o_ref, **static):
    _bce_body(None, x_ref, t_ref, o_ref, **static)


def _bce_kernel_weighted(w_sref, x_ref, t_ref, o_ref, **static):
    _bce_body(w_sref, x_ref, t_ref, o_ref, **static)


def bce_loss(logits, target, weight=None):
    """Equivalent of BCELoss(weight)(logits, target) from the PyTorch module.

    logits: float array, any shape (e.g. NCHW).
    target: same shape; for the weighted path the module does `self.weight[target]`,
            so target values must be valid class indices (0/1 for a 2-class weight).
    weight: optional 1-D per-class weight.
    """
    x = jnp.asarray(logits)
    if x.dtype == jnp.float64:
        x = x.astype(jnp.float32)
    t = jnp.asarray(target)
    if not jnp.issubdtype(t.dtype, jnp.floating):
        # bool/int targets: ship as bf16 (exact for small class indices) to halve the
        # target HBM stream; the kernel upcasts to f32.
        t = t.astype(jnp.bfloat16)
    elif t.dtype == jnp.float64:
        t = t.astype(jnp.float32)

    n = x.size
    x_f = x.reshape(-1)
    t_f = t.reshape(-1)

    rows = _cdiv(n, LANE)
    if n != rows * LANE:
        # TODO(synk): genuinely ragged n (n % 128 != 0) still pays one jnp.pad copy per
        # stream; lane-aligned sizes (the common NCHW case) take the copy-free path.
        pad = rows * LANE - n
        x_f = jnp.pad(x_f, (0, pad))
        t_f = jnp.pad(t_f, (0, pad))
    x2 = x_f.reshape(rows, LANE)     # zero-copy reshape for lane-aligned sizes
    t2 = t_f.reshape(rows, LANE)

    sub = max(_sublane(x2.dtype), _sublane(t2.dtype))
    if rows <= CHUNK_ROWS:
        block_rows = _round_up(rows, sub)
        chunk_rows = block_rows
    else:
        block_rows = min(MAX_BLOCK_ROWS, _round_up(rows, CHUNK_ROWS))
        chunk_rows = CHUNK_ROWS

    num_blocks = _cdiv(rows, block_rows)
    nsplit = 2 if num_blocks >= 2 else 1        # let megacore shard the outer axis
    blocks_per_split = _cdiv(num_blocks, nsplit)
    total_blocks = nsplit * blocks_per_split
    mask_tail = total_blocks * block_rows * LANE != n
    last_blk = num_blocks - 1                   # clamp so overhang steps never DMA fully OOB

    static = dict(block_rows=block_rows, chunk_rows=chunk_rows, lane=LANE,
                  n_valid=n, mask_tail=mask_tail)

    if weight is None:
        in_map = lambda p, i: (jnp.minimum(p * blocks_per_split + i, last_blk), 0)
        out_map = lambda p, i: (p, 0, 0)
        num_prefetch = 0
        kernel = partial(_bce_kernel, **static)
        operands = (x2, t2)
    else:
        w_arr = jnp.asarray(weight, jnp.float32).reshape(-1)
        static["nclasses"] = int(w_arr.shape[0])
        in_map = lambda p, i, w: (jnp.minimum(p * blocks_per_split + i, last_blk), 0)
        out_map = lambda p, i, w: (p, 0, 0)
        num_prefetch = 1
        kernel = partial(_bce_kernel_weighted, **static)
        operands = (w_arr, x2, t2)

    gs = pltpu.PrefetchScalarGridSpec(
        num_scalar_prefetch=num_prefetch,
        grid=(nsplit, blocks_per_split),
        in_specs=[pl.BlockSpec((block_rows, LANE), in_map),
                  pl.BlockSpec((block_rows, LANE), in_map)],
        out_specs=pl.BlockSpec((1, 8, LANE), out_map),
    )
    # TODO(synk): on v7x, pltpu.CORE_PARALLEL on the leading axis would pin the 2-way
    # split onto both TensorCores; "parallel" is the portable, always-compiling choice.
    cparams = pltpu.CompilerParams(
        dimension_semantics=("parallel", "arbitrary"),
        vmem_limit_bytes=VMEM_LIMIT_BYTES,
    )
    partials = pl.pallas_call(
        kernel,
        out_shape=jax.ShapeDtypeStruct((nsplit, 8, LANE), jnp.float32),
        grid_spec=gs,
        compiler_params=cparams,
    )(*operands)

    # Tiny final reduce + mean (F.binary_cross_entropy divides by numel).
    return partials.sum() / jnp.float32(n)


def _reference(logits, target, weight=None):
    x = jnp.asarray(logits).astype(jnp.float32)
    t = jnp.asarray(target).astype(jnp.float32)
    p = 1.0 / (1.0 + jnp.exp(-x))
    log_p = jnp.maximum(jnp.log(p), -100.0)
    log_1mp = jnp.maximum(jnp.log1p(-p), -100.0)
    loss = -(t * log_p + (1.0 - t) * log_1mp)
    if weight is not None:
        loss = loss * jnp.asarray(weight, jnp.float32)[jnp.asarray(target).astype(jnp.int32)]
    return jnp.mean(loss)


if __name__ == "__main__":
    key = jax.random.PRNGKey(0)
    k1, k2, k3, k4, k5, k6 = jax.random.split(key, 6)

    # NCHW logits, binary targets (module-sized input), weight=None (module default)
    x = jax.random.normal(k1, (2, 4, 16, 16), dtype=jnp.float32)
    tgt = jax.random.bernoulli(k2, 0.5, (2, 4, 16, 16)).astype(jnp.float32)
    loss = bce_loss(x, tgt)
    jax.block_until_ready(loss)
    assert jnp.allclose(loss, _reference(x, tgt), atol=1e-5, rtol=1e-4)

    # class-weight path: weight[target] from SMEM scalars, bool targets -> bf16 stream
    class_w = jnp.array([0.3, 0.7], dtype=jnp.float32)
    tgt_b = jax.random.bernoulli(k2, 0.5, (2, 4, 16, 16))
    loss_w = bce_loss(x, tgt_b, weight=class_w)
    jax.block_until_ready(loss_w)
    assert jnp.allclose(loss_w, _reference(x, tgt_b, weight=class_w), atol=1e-5, rtol=1e-4)

    # ragged size -> exercises the (minimal) pad path and in-kernel tail mask
    xr = jax.random.normal(k3, (3, 5, 7, 9), dtype=jnp.float32)
    tr = jax.random.bernoulli(k4, 0.5, (3, 5, 7, 9)).astype(jnp.float32)
    loss_r = bce_loss(xr, tr)
    jax.block_until_ready(loss_r)
    assert jnp.allclose(loss_r, _reference(xr, tr), atol=1e-5, rtol=1e-4)

    # saturated logits -> torch-style fp32-sigmoid saturation + -100 clamp behavior
    # (looser tolerance: a 1-ulp difference in p near the saturation cliff shifts the
    # clamped log term, which is inherent to torch's sigmoid->BCE composition)
    xs = jnp.array([-150., -50., -30., -20., -8., -5., -0.5, 0.,
                    0.5, 5., 8., 17.5, 20., 30., 50., 150.], dtype=jnp.float32)
    ts = jnp.array([1., 0.] * 8, dtype=jnp.float32)
    loss_s = bce_loss(xs, ts)
    jax.block_until_ready(loss_s)
    assert jnp.allclose(loss_s, _reference(xs, ts), atol=1e-3, rtol=1e-3)

    # larger size -> multi-block grid, 2-way parallel split, masked tail block only,
    # weighted path with bool (bf16) targets
    xl = jax.random.normal(k5, (2, 4, 384, 384), dtype=jnp.float32)
    tl = jax.random.bernoulli(k6, 0.5, (2, 4, 384, 384))
    loss_l = bce_loss(xl, tl, weight=class_w)
    jax.block_until_ready(loss_l)
    assert jnp.allclose(loss_l, _reference(xl, tl, weight=class_w), atol=1e-5, rtol=1e-4)

    print("KERNEL_OK")
</pallas_src>

<mosaic_0001>
module attributes {stable_mosaic.version = 11 : i64} {
  func.func @_bce_kernel(%arg0: i32, %arg1: i32, %arg2: memref<16x128xf32, #tpu.memory_space<vmem>>, %arg3: memref<16x128xf32, #tpu.memory_space<vmem>>, %arg4: memref<1x8x128xf32, #tpu.memory_space<vmem>>) attributes {dimension_semantics = [#tpu.dimension_semantics<parallel>, #tpu.dimension_semantics<arbitrary>], iteration_bounds = array<i64: 1, 1>, scalar_prefetch = 0 : i64, scratch_operands = 0 : i64, tpu.core_type = #tpu.core_type<tc>, window_params = [{transform_indices = @transform_0, window_bounds = array<i64: 16, 128>}, {transform_indices = @transform_1, window_bounds = array<i64: 16, 128>}, {transform_indices = @transform_2, window_bounds = array<i64: 1, 8, 128>}]} {
    %c0_i32 = arith.constant 0 : i32
    %0 = arith.cmpi eq, %arg1, %c0_i32 : i32
    %1 = arith.extui %0 : i1 to i32
    %c0_i32_0 = arith.constant 0 : i32
    %2 = arith.cmpi ne, %1, %c0_i32_0 : i32
    scf.if %2 {
      %cst_20 = arith.constant 0.000000e+00 : f32
      %41 = vector.broadcast %cst_20 : f32 to vector<1x8x128xf32>
      %c0_21 = arith.constant 0 : index
      %c0_22 = arith.constant 0 : index
      %c0_23 = arith.constant 0 : index
      %42 = vector.load %arg4[%c0_21, %c0_22, %c0_23] : memref<1x8x128xf32, #tpu.memory_space<vmem>>, vector<1x8x128xf32>
      tpu.vector_store %arg4[%c0_21, %c0_22, %c0_23], %41 {strides = array<i32>} : memref<1x8x128xf32, #tpu.memory_space<vmem>>, vector<1x8x128xf32>,
    } else {
    }
    %c0_i32_1 = arith.constant 0 : i32
    %c1_i32 = arith.constant 1 : i32
    %3 = arith.muli %c0_i32_1, %c1_i32 : i32
    %c0_i32_2 = arith.constant 0 : i32
    %4 = arith.addi %c0_i32_2, %3 : i32
    %c16_i32 = arith.constant 16 : i32
    %5 = arith.muli %4, %c16_i32 : i32
    %6 = tpu.assume_multiple %5, 16 : i32
    %7 = arith.index_cast %6 : i32 to index
    %c0 = arith.constant 0 : index
    %8 = vector.load %arg2[%7, %c0] : memref<16x128xf32, #tpu.memory_space<vmem>>, vector<16x128xf32>
    %9 = arith.index_cast %6 : i32 to index
    %c0_3 = arith.constant 0 : index
    %10 = vector.load %arg3[%9, %c0_3] : memref<16x128xf32, #tpu.memory_space<vmem>>, vector<16x128xf32>
    %cst = arith.constant 0.000000e+00 : f32
    %11 = vector.broadcast %cst : f32 to vector<16x128xf32>
    %12 = arith.subf %11, %8 : vector<16x128xf32>
    %13 = math.exp %12 : vector<16x128xf32>
    %cst_4 = arith.constant 1.000000e+00 : f32
    %14 = vector.broadcast %cst_4 : f32 to vector<16x128xf32>
    %15 = arith.addf %14, %13 : vector<16x128xf32>
    %cst_5 = arith.constant 1.000000e+00 : f32
    %16 = vector.broadcast %cst_5 : f32 to vector<16x128xf32>
    %17 = arith.divf %16, %15 : vector<16x128xf32>
    %18 = math.log1p %13 : vector<16x128xf32>
    %cst_6 = arith.constant 0.000000e+00 : f32
    %19 = vector.broadcast %cst_6 : f32 to vector<16x128xf32>
    %20 = arith.subf %19, %18 : vector<16x128xf32>
    %cst_7 = arith.constant -1.000000e+02 : f32
    %21 = vector.broadcast %cst_7 : f32 to vector<16x128xf32>
    %22 = arith.maximumf %20, %21 : vector<16x128xf32>
    %cst_8 = arith.constant 0.000000e+00 : f32
    %23 = vector.broadcast %cst_8 : f32 to vector<16x128xf32>
    %24 = arith.subf %23, %17 : vector<16x128xf32>
    %25 = math.log1p %24 : vector<16x128xf32>
    %cst_9 = arith.constant -1.000000e+02 : f32
    %26 = vector.broadcast %cst_9 : f32 to vector<16x128xf32>
    %27 = arith.maximumf %25, %26 : vector<16x128xf32>
    %28 = arith.mulf %10, %22 : vector<16x128xf32>
    %cst_10 = arith.constant 1.000000e+00 : f32
    %29 = vector.broadcast %cst_10 : f32 to vector<16x128xf32>
    %30 = arith.subf %29, %10 : vector<16x128xf32>
    %31 = arith.mulf %30, %27 : vector<16x128xf32>
    %32 = arith.addf %28, %31 : vector<16x128xf32>
    %cst_11 = arith.constant 0.000000e+00 : f32
    %33 = vector.broadcast %cst_11 : f32 to vector<16x128xf32>
    %34 = arith.subf %33, %32 : vector<16x128xf32>
    %c0_12 = arith.constant 0 : index
    %c0_13 = arith.constant 0 : index
    %c0_14 = arith.constant 0 : index
    %35 = vector.load %arg4[%c0_12, %c0_13, %c0_14] : memref<1x8x128xf32, #tpu.memory_space<vmem>>, vector<1x8x128xf32>
    %36 = vector.shape_cast %34 : vector<16x128xf32> to vector<2x8x128xf32>
    %cst_15 = arith.constant dense<0.000000e+00> : vector<8x128xf32>
    %37 = vector.multi_reduction <add>, %36, %cst_15 [0] : vector<2x8x128xf32> to vector<8x128xf32>
    %38 = vector.shape_cast %37 : vector<8x128xf32> to vector<1x8x128xf32>
    %39 = arith.addf %35, %38 : vector<1x8x128xf32>
    %c0_16 = arith.constant 0 : index
    %c0_17 = arith.constant 0 : index
    %c0_18 = arith.constant 0 : index
    %40 = vector.load %arg4[%c0_16, %c0_17, %c0_18] : memref<1x8x128xf32, #tpu.memory_space<vmem>>, vector<1x8x128xf32>
    tpu.vector_store %arg4[%c0_16, %c0_17, %c0_18], %39 {strides = array<i32>} : memref<1x8x128xf32, #tpu.memory_space<vmem>>, vector<1x8x128xf32>,
    %c1_i32_19 = arith.constant 1 : i32
    return
  }
  func.func @transform_0(%arg0: i32, %arg1: i32) -> (i32, i32) {
    %c1_i32 = arith.constant 1 : i32
    %0 = arith.muli %arg0, %c1_i32 : i32
    %1 = arith.addi %0, %arg1 : i32
    %c0_i32 = arith.constant 0 : i32
    %2 = arith.minsi %1, %c0_i32 : i32
    %c0_i32_0 = arith.constant 0 : i32
    %c0_i32_1 = arith.constant 0 : i32
    return %2, %c0_i32_0 : i32, i32
  }
  func.func @transform_1(%arg0: i32, %arg1: i32) -> (i32, i32) {
    %c1_i32 = arith.constant 1 : i32
    %0 = arith.muli %arg0, %c1_i32 : i32
    %1 = arith.addi %0, %arg1 : i32
    %c0_i32 = arith.constant 0 : i32
    %2 = arith.minsi %1, %c0_i32 : i32
    %c0_i32_0 = arith.constant 0 : i32
    %c0_i32_1 = arith.constant 0 : i32
    return %2, %c0_i32_0 : i32, i32
  }
  func.func @transform_2(%arg0: i32, %arg1: i32) -> (i32, i32, i32) {
    %c0_i32 = arith.constant 0 : i32
    %c0_i32_0 = arith.constant 0 : i32
    %c0_i32_1 = arith.constant 0 : i32
    return %arg0, %c0_i32, %c0_i32_0 : i32, i32, i32
  }
}

</mosaic_0001>

<llo_original>
// kernel: tpu_custom_call.1
$region0: #{tpu_custom_call.1}
  #allocation0 [shape = 'u32[]', space=smem, size = 0x4, offset = 0x4, fixed_abs, tag = 'smem constant byte address 0x4 - core index']
  #allocation1 [shape = 'u32[72,128]{1,0:T(1,128)}', space=vmem, size = 0x9000, scoped, tag = 'internal scratch']
  %s0 = inlined_call_operand.hbm [shape: f32[16,128], index: 0, kind: input, shape index: {}]
  %s1 = inlined_call_operand.hbm [shape: f32[16,128], index: 1, kind: input, shape index: {}]
  %s2 = inlined_call_operand.hbm [shape: f32[1,8,128], index: 2, kind: output, shape index: {}]
  %s3 = sld [smem:[#allocation0]]
  $region30: #{tpu_custom_call.1} parent=0
    _
  %s5 = ssub.s32 1, %s3
  %s6 = scalar_select 0, %s5, %s3
  $region1: #{tpu_custom_call.1} parent=0
    #allocation2 [shape = 'u8[8192]{0}', space=vmem, size = 0x2000, scoped, tag = 'input window, operand 0, single buffered']
    #allocation3 [shape = 's32[1]{0}', space=sflag, size = 0x4, scoped, tag = 'scoped memory for tpu_custom_call.1']
    #allocation4 [shape = 's32[1]{0}', space=sflag, size = 0x4, scoped, tag = 'scoped memory for tpu_custom_call.1']
    #allocation5 [shape = 'u8[8192]{0}', space=vmem, size = 0x2000, scoped, tag = 'input window, operand 1, single buffered']
    #allocation6 [shape = 's32[1]{0}', space=sflag, size = 0x4, scoped, tag = 'scoped memory for tpu_custom_call.1']
    #allocation7 [shape = 'u8[4096]{0}', space=vmem, size = 0x1000, scoped, tag = 'output window, operand 0, single buffered']
    %7 = vsyncpa [#allocation3], 0
    %8 = vsyncpa [#allocation6], 0
    %9 = vsyncpa [#allocation4], 0
    // Predicated region
    $region2: #{tpu_custom_call.1} parent=1 // pred_check
      _
    $region3: #{tpu_custom_call.1} parent=1 // pred_check_branch
      %11 = sbr.rel (0) target = $region5
    $region4: #{tpu_custom_call.1} parent=1 // pred_region
      %s12 = sadd.s32 0, 0
      %p13 = scmp.lt.s32.totalorder %s12, 0
      %s14 = scalar_select %p13, %s12, 0
      %s15 = smul.u32 2, %s14
      %17 = vsyncadd [#allocation3], 0
      %s18 = smul.addr %s15, 8
      %s19 = scalar_lea.hbm %s0, %s18
      %s20 = sshll.u32 %s19, 4
      %s21 = int_to_ptr.hbm [resolvable:$true] %s20
      %s22 = sshll.u32 [#allocation2], 4
      %s23 = int_to_ptr.vmem [resolvable:$true] %s22
      %28 = dma.hbm_to_vmem [thread:$0]  %s21, 256, %s23, [#allocation3], 128, 128, 8
    $region5: #{tpu_custom_call.1} parent=1 // pred_fallthru
      _
    // Predicated region
    $region6: #{tpu_custom_call.1} parent=1 // pred_check
      _
    $region7: #{tpu_custom_call.1} parent=1 // pred_check_branch
      %30 = sbr.rel (0) target = $region9
    $region8: #{tpu_custom_call.1} parent=1 // pred_region
      %s31 = sadd.s32 0, 0
      %p32 = scmp.lt.s32.totalorder %s31, 0
      %s33 = scalar_select %p32, %s31, 0
      %s34 = smul.u32 2, %s33
      %36 = vsyncadd [#allocation6], 0
      %s37 = smul.addr %s34, 8
      %s38 = scalar_lea.hbm %s1, %s37
      %s39 = sshll.u32 %s38, 4
      %s40 = int_to_ptr.hbm [resolvable:$true] %s39
      %s41 = sshll.u32 [#allocation5], 4
      %s42 = int_to_ptr.vmem [resolvable:$true] %s41
      %47 = dma.hbm_to_vmem [thread:$0]  %s40, 256, %s42, [#allocation6], 128, 128, 8
    $region9: #{tpu_custom_call.1} parent=1 // pred_fallthru
      _
    // Predicated region
    $region10: #{tpu_custom_call.1} parent=1 // pred_check
      _
    $region11: #{tpu_custom_call.1} parent=1 // pred_check_branch
      %49 = sbr.rel (0) target = $region13
    $region12: #{tpu_custom_call.1} parent=1 // pred_region
      %51 = dma.done [#allocation3], 256
    $region13: #{tpu_custom_call.1} parent=1 // pred_fallthru
      _
    // Predicated region
    $region14: #{tpu_custom_call.1} parent=1 // pred_check
      _
    $region15: #{tpu_custom_call.1} parent=1 // pred_check_branch
      %53 = sbr.rel (0) target = $region17
    $region16: #{tpu_custom_call.1} parent=1 // pred_region
      %55 = dma.done [#allocation6], 256
    $region17: #{tpu_custom_call.1} parent=1 // pred_fallthru
      _
    %s56 = sadd.s32 0, 0
    %p57 = scmp.lt.s32.totalorder %s56, 0
    %s58 = scalar_select %p57, %s56, 0
    %s59 = smul.u32 2, %s58
    %s60 = sadd.s32 0, 0
    %p61 = scmp.lt.s32.totalorder %s60, 0
    %s62 = scalar_select %p61, %s60, 0
    %s63 = smul.u32 2, %s62
    %p64 = scmp.eq.s32.totalorder 0, 0
    // Predicated region
    $region18: #{tpu_custom_call.1} parent=1 // pred_check
      %p65 = pneg %p64
    $region19: #{tpu_custom_call.1} parent=1 // pred_check_branch
      %67 = sbr.rel (%p65) target = $region21
    $region20: #{tpu_custom_call.1} parent=1 // pred_region
      %68 = vst [vmem:[#allocation7] sm:$0xff] 0.0
    $region21: #{tpu_custom_call.1} parent=1 // pred_fallthru
      _
    %v69 = vld [vmem:[#allocation2] sm:$0xff]
    %v70 = vld [vmem:[#allocation2 + $0x8] sm:$0xff]
    %v71 = vld [vmem:[#allocation5] sm:$0xff]
    %v72 = vld [vmem:[#allocation5 + $0x8] sm:$0xff]
    %v73 = vsub.f32 0.0, %v69
    %v74 = vsub.f32 0.0, %v70
    %v75 = vmul.f32 %v73, 1.442695
    %v76 = vpow.pop %v75
    %v77 = vmul.f32 %v74, 1.442695
    %v78 = vpow.pop %v77
    %v79 = vadd.f32 %v76, 1.0
    %v80 = vadd.f32 %v78, 1.0
    %v81 = vrcp.pop %v79
    %v82 = vmul.f32 %v79, %v81
    %v83 = vsub.f32 1.0, %v82
    %v84 = vmul.f32 %v81, %v83
    %v85 = vadd.f32 %v81, %v84
    %vm86 = vweird.f32 %v79
    %vm87 = vweird.f32 %v81
    %vm88 = vmor %vm86, %vm87
    %v89 = vsel %vm88, %v81, %v85
    %v90 = vand.u32 2147483647, %v79
    %vm91 = vcmp.eq.f32.partialorder %v90, 8.507059e+37
    %v92 = vand.u32 %v79, 2147483648
    %v93 = vor.u32 1.1754944e-38, %v92
    %v94 = vsel %vm91, %v93, %v89
    %v95 = vmul.f32 1.0, %v94
    %v96 = vrcp.pop %v80
    %v97 = vmul.f32 %v80, %v96
    %v98 = vsub.f32 1.0, %v97
    %v99 = vmul.f32 %v96, %v98
    %v100 = vadd.f32 %v96, %v99
    %vm101 = vweird.f32 %v80
    %vm102 = vweird.f32 %v96
    %vm103 = vmor %vm101, %vm102
    %v104 = vsel %vm103, %v96, %v100
    %v105 = vand.u32 2147483647, %v80
    %vm106 = vcmp.eq.f32.partialorder %v105, 8.507059e+37
    %v107 = vand.u32 %v80, 2147483648
    %v108 = vor.u32 1.1754944e-38, %v107
    %v109 = vsel %vm106, %v108, %v104
    %v110 = vmul.f32 1.0, %v109
    %v111 = vadd.f32 %v76, 1.0
    %v112 = vlog2.pop %v111
    %v113 = vmul.f32 %v112, 0.6931472
    %v114 = vmul.f32 -0.5, %v76
    %v115 = vadd.f32 %v114, 1.0
    %v116 = vmul.f32 %v115, %v76
    %v117 = vand.u32 2147483647, %v76
    %vm118 = vcmp.lt.f32.partialorder %v117, 0.0004427343
    %v119 = vsel %vm118, %v116, %v113
    %v120 = vadd.f32 %v78, 1.0
    %v121 = vlog2.pop %v120
    %v122 = vmul.f32 %v121, 0.6931472
    %v123 = vmul.f32 -0.5, %v78
    %v124 = vadd.f32 %v123, 1.0
    %v125 = vmul.f32 %v124, %v78
    %v126 = vand.u32 2147483647, %v78
    %vm127 = vcmp.lt.f32.partialorder %v126, 0.0004427343
    %v128 = vsel %vm127, %v125, %v122
    %v129 = vsub.f32 0.0, %v119
    %v130 = vsub.f32 0.0, %v128
    %v131 = vmax.f32 %v129, -100.0
    %v132 = vmax.f32 %v130, -100.0
    %v133 = vsub.f32 0.0, %v95
    %v134 = vsub.f32 0.0, %v110
    %v135 = vadd.f32 %v133, 1.0
    %v136 = vlog2.pop %v135
    %v137 = vmul.f32 %v136, 0.6931472
    %v138 = vmul.f32 -0.5, %v133
    %v139 = vadd.f32 %v138, 1.0
    %v140 = vmul.f32 %v139, %v133
    %v141 = vand.u32 2147483647, %v133
    %vm142 = vcmp.lt.f32.partialorder %v141, 0.0004427343
    %v143 = vsel %vm142, %v140, %v137
    %v144 = vadd.f32 %v134, 1.0
    %v145 = vlog2.pop %v144
    %v146 = vmul.f32 %v145, 0.6931472
    %v147 = vmul.f32 -0.5, %v134
    %v148 = vadd.f32 %v147, 1.0
    %v149 = vmul.f32 %v148, %v134
    %v150 = vand.u32 2147483647, %v134
    %vm151 = vcmp.lt.f32.partialorder %v150, 0.0004427343
    %v152 = vsel %vm151, %v149, %v146
    %v153 = vmax.f32 %v143, -100.0
    %v154 = vmax.f32 %v152, -100.0
    %v155 = vmul.f32 %v71, %v131
    %v156 = vmul.f32 %v72, %v132
    %v157 = vsub.f32 1.0, %v71
    %v158 = vsub.f32 1.0, %v72
    %v159 = vmul.f32 %v157, %v153
    %v160 = vmul.f32 %v158, %v154
    %v161 = vadd.f32 %v155, %v159
    %v162 = vadd.f32 %v156, %v160
    %v163 = vsub.f32 0.0, %v161
    %v164 = vsub.f32 0.0, %v162
    %v165 = vld [vmem:[#allocation7] sm:$0xff]
    %v166 = vadd.f32 %v163, %v164
    %v167 = vadd.f32 %v165, %v166
    %168 = vst [vmem:[#allocation7] sm:$0xff] %v167
    // Predicated region
    $region22: #{tpu_custom_call.1} parent=1 // pred_check
      _
    $region23: #{tpu_custom_call.1} parent=1 // pred_check_branch
      %170 = sbr.rel (0) target = $region25
    $region24: #{tpu_custom_call.1} parent=1 // pred_region
      %172 = vsyncadd [#allocation4], 0
      %s174 = sshll.u32 [#allocation7], 4
      %s175 = int_to_ptr.vmem [resolvable:$true] %s174
      %s176 = sshll.u32 %s2, 4
      %s177 = int_to_ptr.hbm [resolvable:$true] %s176
      %179 = dma.vmem_to_hbm [thread:$0]  %s175, 128, %s177, [#allocation4]
    $region25: #{tpu_custom_call.1} parent=1 // pred_fallthru
      _
    // Predicated region
    $region26: #{tpu_custom_call.1} parent=1 // pred_check
      _
    $region27: #{tpu_custom_call.1} parent=1 // pred_check_branch
      %181 = sbr.rel (0) target = $region29
    $region28: #{tpu_custom_call.1} parent=1 // pred_region
      %183 = dma.done [#allocation4], 128
    $region29: #{tpu_custom_call.1} parent=1 // pred_fallthru
      _
    %184 = vsyncpa [#allocation3], 1
    %185 = vsyncpa [#allocation6], 1
    %186 = vsyncpa [#allocation4], 1

</llo_original>
